<compile_context>
chip_gen: v5e
topology: v5e:2x2
jax: 0.10.0
libtpu: 0.0.40
codegen_flags: <defaults>
</compile_context>

<pallas_src>
import functools
import math

import jax
import jax.numpy as jnp
import numpy as np
from jax.experimental import pallas as pl
from jax.experimental.pallas import tpu as pltpu


def _round_up(x, m):
    return (x + m - 1) // m * m


# ---------------------------------------------------------------------------
# Kernel 1: fused QKV projection (single wide matmul -> q, k, v)
# ---------------------------------------------------------------------------
def _qkv_proj_kernel(x_ref, w_ref, q_ref, k_ref, v_ref, *, d_out_p):
    # x_ref: (TBLK, d_in_p); w_ref: (d_in_p, 3*d_out_p) -- one MXU weight load.
    qkv = jnp.dot(x_ref[...], w_ref[...], preferred_element_type=jnp.float32)
    q_ref[...] = qkv[:, :d_out_p].astype(q_ref.dtype)
    k_ref[...] = qkv[:, d_out_p:2 * d_out_p].astype(k_ref.dtype)
    v_ref[...] = qkv[:, 2 * d_out_p:].astype(v_ref.dtype)


# ---------------------------------------------------------------------------
# Kernel 2: flash-style causal attention with online softmax
# ---------------------------------------------------------------------------
def _flash_attn_kernel(q_ref, k_ref, v_ref, o_ref, m_ref, l_ref, acc_ref):
    qi = pl.program_id(1)
    ki = pl.program_id(2)

    @pl.when(ki == 0)
    def _init():
        m_ref[...] = jnp.full_like(m_ref, -jnp.inf)
        l_ref[...] = jnp.zeros_like(l_ref)
        acc_ref[...] = jnp.zeros_like(acc_ref)

    def _update(apply_mask):
        q = q_ref[...]                                      # (TQ, Dp), compute dtype
        k = k_ref[...]                                      # (TK, Dp)
        # 1/sqrt(d_out) is already folded into W_query, so no O(T^2) scaling here.
        s = jax.lax.dot_general(
            q, k, (((1,), (1,)), ((), ())),
            preferred_element_type=jnp.float32)             # (TQ, TK) f32
        if apply_mask:
            # Diagonal tile only (TQ == TK): local col > row <=> global causal mask.
            tq, tk = s.shape
            row = jax.lax.broadcasted_iota(jnp.int32, (tq, tk), 0)
            col = jax.lax.broadcasted_iota(jnp.int32, (tq, tk), 1)
            s = jnp.where(col > row, -jnp.inf, s)
        m_prev = m_ref[...]
        m_new = jnp.maximum(m_prev, jnp.max(s, axis=-1, keepdims=True))
        alpha = jnp.exp(m_prev - m_new)
        p = jnp.exp(s - m_new)
        l_ref[...] = alpha * l_ref[...] + jnp.sum(p, axis=-1, keepdims=True)
        acc_ref[...] = alpha * acc_ref[...] + jnp.dot(
            p.astype(v_ref.dtype), v_ref[...],
            preferred_element_type=jnp.float32)
        m_ref[...] = m_new

    # Strictly-below-diagonal kv tiles: fully unmasked, no iota/compare needed.
    @pl.when(ki < qi)
    def _off_diag():
        _update(apply_mask=False)

    # Diagonal tile: mask + finalize (all kv tiles with ki > qi are dead and
    # are skipped entirely -- their DMA is also elided via the clamped index_map).
    @pl.when(ki == qi)
    def _diag_and_finalize():
        _update(apply_mask=True)
        # Softmax normalization folded into the once-per-q-tile finalize
        # (O(T*d) instead of O(T^2)).
        o_ref[...] = (acc_ref[...] / l_ref[...]).astype(o_ref.dtype)


# ---------------------------------------------------------------------------
# Wrapper
# ---------------------------------------------------------------------------
def causal_attention(x, w_query, w_key, w_value, *,
                     block_t=128, compute_dtype=None,
                     vmem_limit_bytes=32 * 1024 * 1024):
    """x: (B, T, d_in); w_*: (d_in, d_out). Returns (B, T, d_out) in x.dtype.

    compute_dtype: dtype for the MXU operands (e.g. jnp.bfloat16 on v5e/v6e);
    accumulation and softmax statistics always stay in float32.
    """
    b, t, d_in = x.shape
    d_out = w_query.shape[1]
    cdt = x.dtype if compute_dtype is None else compute_dtype

    # Lane-dense internal widths (multiples of the 128-lane vreg width) and a
    # sequence tile that satisfies (sublane, lane) layout rules for f32 and bf16.
    d_in_p = _round_up(d_in, 128)
    d_out_p = _round_up(d_out, 128)
    blk = min(block_t, _round_up(t, 16))
    t_p = _round_up(t, blk)
    n_t = t_p // blk

    scale = 1.0 / math.sqrt(d_out)  # uses the *unpadded* d_out, as in PyTorch

    # Fused, padded QKV weight (d_in_p, 3*d_out_p). Zero padding is exact:
    # padded feature columns contribute 0 to scores and to the context.
    def _pad_w(w):
        return jnp.pad(w, ((0, d_in_p - d_in), (0, d_out_p - d_out)))

    w_fused = jnp.concatenate(
        [_pad_w(w_query * scale), _pad_w(w_key), _pad_w(w_value)], axis=1
    ).astype(cdt)

    # Zero-pad x along seq/feature. Padded key rows lie "in the future" of every
    # real query row, so the causal mask makes them invisible; padded query rows
    # are sliced off at the end.
    x_p = jnp.pad(x, ((0, 0), (0, t_p - t), (0, d_in_p - d_in))).astype(cdt)

    # --- 1) fused QKV projection --------------------------------------------
    qkv_out = (jax.ShapeDtypeStruct((b, t_p, d_out_p), cdt),) * 3
    q, k, v = pl.pallas_call(
        functools.partial(_qkv_proj_kernel, d_out_p=d_out_p),
        out_shape=qkv_out,
        grid_spec=pltpu.PrefetchScalarGridSpec(
            num_scalar_prefetch=0,
            grid=(b, n_t),
            in_specs=[
                pl.BlockSpec((pl.Squeezed(), blk, d_in_p),
                             lambda bi, ti: (bi, ti, 0)),
                pl.BlockSpec((d_in_p, 3 * d_out_p), lambda bi, ti: (0, 0)),
            ],
            out_specs=[
                pl.BlockSpec((pl.Squeezed(), blk, d_out_p),
                             lambda bi, ti: (bi, ti, 0))
                for _ in range(3)
            ],
        ),
        compiler_params=pltpu.CompilerParams(
            dimension_semantics=("parallel", "parallel"),
            vmem_limit_bytes=vmem_limit_bytes),
    )(x_p, w_fused)

    # --- 2) flash attention ---------------------------------------------------
    # Clamp the kv block index to the q tile: causally-dead tiles (ki > qi) keep
    # the previous block index, so no new DMA is issued for them.
    kv_map = lambda bi, qi, ki: (bi, jnp.minimum(ki, qi), 0)
    out_p = pl.pallas_call(
        _flash_attn_kernel,
        out_shape=jax.ShapeDtypeStruct((b, t_p, d_out_p), x.dtype),
        grid_spec=pltpu.PrefetchScalarGridSpec(
            num_scalar_prefetch=0,
            grid=(b, n_t, n_t),
            in_specs=[
                pl.BlockSpec((pl.Squeezed(), blk, d_out_p),
                             lambda bi, qi, ki: (bi, qi, 0)),
                pl.BlockSpec((pl.Squeezed(), blk, d_out_p), kv_map),
                pl.BlockSpec((pl.Squeezed(), blk, d_out_p), kv_map),
            ],
            out_specs=pl.BlockSpec((pl.Squeezed(), blk, d_out_p),
                                   lambda bi, qi, ki: (bi, qi, 0)),
            scratch_shapes=[
                pltpu.VMEM((blk, 1), jnp.float32),        # running max m
                pltpu.VMEM((blk, 1), jnp.float32),        # running denom l
                pltpu.VMEM((blk, d_out_p), jnp.float32),  # running context acc
            ],
        ),
        compiler_params=pltpu.CompilerParams(
            # q-tile axis "parallel" so v7x's 2 TensorCores both get work even
            # at small batch; kv axis is the online-softmax reduction.
            dimension_semantics=("parallel", "parallel", "arbitrary"),
            vmem_limit_bytes=vmem_limit_bytes),
    )(q, k, v)

    # TODO(synk): nn.Dropout on attention weights is identity at inference; no
    # training-mode stochastic dropout is applied here.

    return out_p[:, :t, :d_out]


# ---------------------------------------------------------------------------
# Pure numpy (float64) reference mirroring the PyTorch forward
# ---------------------------------------------------------------------------
def reference_attention(x, w_query, w_key, w_value):
    x64 = np.asarray(x, np.float64)
    q = x64 @ np.asarray(w_query, np.float64)
    k = x64 @ np.asarray(w_key, np.float64)
    v = x64 @ np.asarray(w_value, np.float64)
    scores = q @ np.swapaxes(k, 1, 2)
    t = x.shape[1]
    mask = np.triu(np.ones((t, t), dtype=bool), k=1)
    scores = np.where(mask[None, :, :], -np.inf, scores)
    scores = scores / math.sqrt(k.shape[-1])
    scores = scores - scores.max(-1, keepdims=True)
    p = np.exp(scores)
    attn = p / p.sum(-1, keepdims=True)
    return attn @ v


if __name__ == "__main__":
    # Small shapes consistent with the module's forward: (batch, seq, d_in).
    # seq=256 exercises multiple q/kv tiles (flash path + causal tile skipping).
    batch, seq, d_in, d_out = 2, 256, 64, 64
    context_length = seq
    dropout = 0.0  # inference semantics

    key = jax.random.PRNGKey(0)
    kx, kq, kk, kv = jax.random.split(key, 4)

    x = jax.random.normal(kx, (batch, seq, d_in), dtype=jnp.float32)
    # Deterministic "Linear" weights stored as (d_in, d_out).
    bound = 1.0 / math.sqrt(d_in)
    w_query = jax.random.uniform(kq, (d_in, d_out), jnp.float32, -bound, bound)
    w_key = jax.random.uniform(kk, (d_in, d_out), jnp.float32, -bound, bound)
    w_value = jax.random.uniform(kv, (d_in, d_out), jnp.float32, -bound, bound)

    ref = reference_attention(x, w_query, w_key, w_value)

    # f32 operands: strict check.
    out_f32 = causal_attention(x, w_query, w_key, w_value,
                               compute_dtype=jnp.float32)
    out_f32 = jax.block_until_ready(out_f32)
    assert out_f32.shape == (batch, seq, d_out)
    err_f32 = float(np.max(np.abs(np.asarray(out_f32, np.float64) - ref)))
    assert err_f32 < 2e-4, f"f32 max abs err = {err_f32}"

    # bf16 MXU operands (f32 accumulation): looser check.
    out_bf16 = causal_attention(x, w_query, w_key, w_value,
                                compute_dtype=jnp.bfloat16)
    out_bf16 = jax.block_until_ready(out_bf16)
    assert out_bf16.shape == (batch, seq, d_out)
    err_bf16 = float(np.max(np.abs(np.asarray(out_bf16, np.float64) - ref)))
    assert err_bf16 < 8e-2, f"bf16 max abs err = {err_bf16}"

    print("KERNEL_OK")
</pallas_src>

<mosaic_0001>
module attributes {stable_mosaic.version = 11 : i64} {
  func.func @_qkv_proj_kernel(%arg0: i32, %arg1: i32, %arg2: memref<1x128x128xf32, #tpu.memory_space<vmem>>, %arg3: memref<128x384xf32, #tpu.memory_space<vmem>>, %arg4: memref<1x128x128xf32, #tpu.memory_space<vmem>>, %arg5: memref<1x128x128xf32, #tpu.memory_space<vmem>>, %arg6: memref<1x128x128xf32, #tpu.memory_space<vmem>>) attributes {dimension_semantics = [#tpu.dimension_semantics<parallel>, #tpu.dimension_semantics<parallel>], iteration_bounds = array<i64: 2, 2>, scalar_prefetch = 0 : i64, scratch_operands = 0 : i64, tpu.core_type = #tpu.core_type<tc>, window_params = [{transform_indices = @transform_0, window_bounds = array<i64: 1, 128, 128>}, {pipeline_mode = #tpu.pipeline_mode<synchronous>, transform_indices = @transform_1, window_bounds = array<i64: 128, 384>}, {transform_indices = @transform_2, window_bounds = array<i64: 1, 128, 128>}, {transform_indices = @transform_3, window_bounds = array<i64: 1, 128, 128>}, {transform_indices = @transform_4, window_bounds = array<i64: 1, 128, 128>}]} {
    %c0 = arith.constant 0 : index
    %c0_0 = arith.constant 0 : index
    %c0_1 = arith.constant 0 : index
    %0 = vector.load %arg2[%c0, %c0_0, %c0_1] : memref<1x128x128xf32, #tpu.memory_space<vmem>>, vector<1x128x128xf32>
    %1 = vector.shape_cast %0 : vector<1x128x128xf32> to vector<128x128xf32>
    %c0_2 = arith.constant 0 : index
    %c0_3 = arith.constant 0 : index
    %2 = vector.load %arg3[%c0_2, %c0_3] : memref<128x384xf32, #tpu.memory_space<vmem>>, vector<128x384xf32>
    %cst = arith.constant dense<0.000000e+00> : vector<128x384xf32>
    %3 = tpu.matmul %1, %2, %cst {dimension_numbers = #tpu.dot_dimension_numbers<[1], [0], [0], [1], [0, 0, 1, 1], [], []>} : vector<128x128xf32>, vector<128x384xf32>, vector<128x384xf32> -> vector<128x384xf32>
    %4 = vector.extract_strided_slice %3 {offsets = [0, 0], sizes = [128, 128], strides = [1, 1]} : vector<128x384xf32> to vector<128x128xf32>
    %c0_4 = arith.constant 0 : index
    %c0_5 = arith.constant 0 : index
    %c0_6 = arith.constant 0 : index
    %5 = vector.load %arg4[%c0_4, %c0_5, %c0_6] : memref<1x128x128xf32, #tpu.memory_space<vmem>>, vector<1x128x128xf32>
    %6 = vector.shape_cast %5 : vector<1x128x128xf32> to vector<128x128xf32>
    %7 = vector.shape_cast %4 : vector<128x128xf32> to vector<1x128x128xf32>
    tpu.vector_store %arg4[%c0_4, %c0_5, %c0_6], %7 {strides = array<i32>} : memref<1x128x128xf32, #tpu.memory_space<vmem>>, vector<1x128x128xf32>,
    %8 = vector.extract_strided_slice %3 {offsets = [0, 128], sizes = [128, 128], strides = [1, 1]} : vector<128x384xf32> to vector<128x128xf32>
    %c0_7 = arith.constant 0 : index
    %c0_8 = arith.constant 0 : index
    %c0_9 = arith.constant 0 : index
    %9 = vector.load %arg5[%c0_7, %c0_8, %c0_9] : memref<1x128x128xf32, #tpu.memory_space<vmem>>, vector<1x128x128xf32>
    %10 = vector.shape_cast %9 : vector<1x128x128xf32> to vector<128x128xf32>
    %11 = vector.shape_cast %8 : vector<128x128xf32> to vector<1x128x128xf32>
    tpu.vector_store %arg5[%c0_7, %c0_8, %c0_9], %11 {strides = array<i32>} : memref<1x128x128xf32, #tpu.memory_space<vmem>>, vector<1x128x128xf32>,
    %12 = vector.extract_strided_slice %3 {offsets = [0, 256], sizes = [128, 128], strides = [1, 1]} : vector<128x384xf32> to vector<128x128xf32>
    %c0_10 = arith.constant 0 : index
    %c0_11 = arith.constant 0 : index
    %c0_12 = arith.constant 0 : index
    %13 = vector.load %arg6[%c0_10, %c0_11, %c0_12] : memref<1x128x128xf32, #tpu.memory_space<vmem>>, vector<1x128x128xf32>
    %14 = vector.shape_cast %13 : vector<1x128x128xf32> to vector<128x128xf32>
    %15 = vector.shape_cast %12 : vector<128x128xf32> to vector<1x128x128xf32>
    tpu.vector_store %arg6[%c0_10, %c0_11, %c0_12], %15 {strides = array<i32>} : memref<1x128x128xf32, #tpu.memory_space<vmem>>, vector<1x128x128xf32>,
    return
  }
  func.func @transform_0(%arg0: i32, %arg1: i32) -> (i32, i32, i32) {
    %c0_i32 = arith.constant 0 : i32
    %c0_i32_0 = arith.constant 0 : i32
    return %arg0, %arg1, %c0_i32 : i32, i32, i32
  }
  func.func @transform_1(%arg0: i32, %arg1: i32) -> (i32, i32) {
    %c0_i32 = arith.constant 0 : i32
    %c0_i32_0 = arith.constant 0 : i32
    %c0_i32_1 = arith.constant 0 : i32
    return %c0_i32, %c0_i32_0 : i32, i32
  }
  func.func @transform_2(%arg0: i32, %arg1: i32) -> (i32, i32, i32) {
    %c0_i32 = arith.constant 0 : i32
    %c0_i32_0 = arith.constant 0 : i32
    return %arg0, %arg1, %c0_i32 : i32, i32, i32
  }
  func.func @transform_3(%arg0: i32, %arg1: i32) -> (i32, i32, i32) {
    %c0_i32 = arith.constant 0 : i32
    %c0_i32_0 = arith.constant 0 : i32
    return %arg0, %arg1, %c0_i32 : i32, i32, i32
  }
  func.func @transform_4(%arg0: i32, %arg1: i32) -> (i32, i32, i32) {
    %c0_i32 = arith.constant 0 : i32
    %c0_i32_0 = arith.constant 0 : i32
    return %arg0, %arg1, %c0_i32 : i32, i32, i32
  }
}

</mosaic_0001>

<llo_original>
// kernel: tpu_custom_call.1
$region0: #{tpu_custom_call.1}
  #allocation0 [shape = 'u32[]', space=smem, size = 0x4, offset = 0x4, fixed_abs, tag = 'smem constant byte address 0x4 - core index']
  #allocation1 [shape = 'u32[72,128]{1,0:T(1,128)}', space=vmem, size = 0x9000, scoped, tag = 'internal scratch']
  %s0 = inlined_call_operand.hbm [shape: f32[2,256,128], index: 0, kind: input, shape index: {}]
  %s1 = inlined_call_operand.hbm [shape: f32[128,384], index: 1, kind: input, shape index: {}]
  %s2 = inlined_call_operand.hbm [shape: f32[2,256,128], index: 2, kind: output, shape index: {0}]
  %s3 = inlined_call_operand.hbm [shape: f32[2,256,128], index: 3, kind: output, shape index: {1}]
  %s4 = inlined_call_operand.hbm [shape: f32[2,256,128], index: 4, kind: output, shape index: {2}]
  %5 = xla_tuple %s2, %s3, %s4
  %s6 = sld [smem:[#allocation0]]
  $region65: #{tpu_custom_call.1} parent=0
    _
  %s8 = ssub.s32 1, %s6
  %s9 = scalar_select 0, %s8, %s6
  $region1: #{tpu_custom_call.1} parent=0
    #allocation2 [shape = 'u8[131072]{0}', space=vmem, size = 0x20000, scoped, tag = 'input window, operand 0']
    #allocation3 [shape = 's32[2]{0}', space=sflag, size = 0x8, scoped, tag = 'scoped memory for tpu_custom_call.1']
    #allocation4 [shape = 's32[2]{0}', space=sflag, size = 0x8, scoped, tag = 'scoped memory for tpu_custom_call.1']
    #allocation5 [shape = 'u8[196608]{0}', space=vmem, size = 0x30000, scoped, tag = 'input window, operand 1, single buffered']
    #allocation6 [shape = 's32[1]{0}', space=sflag, size = 0x4, scoped, tag = 'scoped memory for tpu_custom_call.1']
    #allocation7 [shape = 'u8[131072]{0}', space=vmem, size = 0x20000, scoped, tag = 'output window, operand 0']
    #allocation8 [shape = 'u8[131072]{0}', space=vmem, size = 0x20000, scoped, tag = 'output window, operand 1']
    #allocation9 [shape = 's32[2]{0}', space=sflag, size = 0x8, scoped, tag = 'scoped memory for tpu_custom_call.1']
    #allocation10 [shape = 'u8[131072]{0}', space=vmem, size = 0x20000, scoped, tag = 'output window, operand 2']
    %10 = vsyncpa [#allocation3], 0
    %s11 = scalar_lea.sflag [#allocation3], 1
    %12 = vsyncpa %s11, 0
    %13 = vsyncpa [#allocation6], 0
    %14 = vsyncpa [#allocation4], 0
    %s15 = scalar_lea.sflag [#allocation4], 1
    %16 = vsyncpa %s15, 0
    %17 = vsyncpa [#allocation9], 0
    %s18 = scalar_lea.sflag [#allocation9], 1
    %19 = vsyncpa %s18, 0
    loop: start=0, step=1, limit=6
    $region2: #{tpu_custom_call.1} parent=1 // loop_pre_header
      _
    $region3: #{tpu_custom_call.1} parent=1 // loop_header
      %s21 = sphi 0, %s25
      %p22 = scmp.ge.s32.totalorder %s21, 6
      %s28 = sphi 0, %s40
      %s29 = sphi 0, %s36
      %s30 = sphi 0, %s28
      %s31 = sphi 0, %s29
      %s32 = sphi 0, %s30
      %s33 = sphi 0, %s31
      %s45 = sphi 0, %s47
      %s48 = sphi 0, %s45
      %s49 = sphi 0, %s48
      %s65 = sphi 0, %s49
      %s69 = sphi 0, %s69
      %s71 = sphi 0, %s69
      %s72 = sphi 0, %s71
      %s86 = sphi 0, %s72
      %s94 = sphi 0, %s96
      %s97 = sphi 0, %s94
      %s98 = sphi 0, %s97
      %s114 = sphi 0, %s98
      %s122 = sphi 0, %s124
      %s125 = sphi 0, %s122
      %s126 = sphi 0, %s125
      %s142 = sphi 0, %s126
      %s150 = sphi 0, %s152
      %s153 = sphi 0, %s150
      %s154 = sphi 0, %s153
      %s170 = sphi 0, %s154
    $region4: #{tpu_custom_call.1} parent=1 // loop_header_branch
      %24 = sbr.rel (%p22) target = $region8
    $region5: #{tpu_custom_call.1} parent=1 // loop_body
      %s26 = ssub.s32 %s21, 1
      %s27 = ssub.s32 %s21, 2
      %s34 = sadd.s32 1, %s29
      %p35 = scmp.ge.s32.totalorder %s34, 2
      %s36 = scalar_select %p35, 0, %s34
      %s37 = sadd.s32 1, %s28
      %s38 = scalar_select %p35, %s37, %s28
      %p39 = scmp.ge.s32.totalorder %s38, 2
      %s40 = scalar_select %p39, 0, %s38
      %s41 = ssub.s32 %s28, %s40
      %s42 = ssub.s32 %s29, %s36
      %s43 = sor.u32 %s41, %s42
      %p44 = scmp.eq.s32.totalorder %s43, 0
      %s46 = sadd.s32 %s45, 1
      %s47 = scalar_select %p44, %s45, %s46
      %p50 = pneg %p44
      %p51 = scmp.eq.s32.totalorder %s21, 3
      %p52 = por %p50, %p51
      %p53 = scmp.ne.s32.totalorder %s45, %s48
      %p54 = scmp.eq.s32.totalorder %s21, 0
      %p55 = por %p53, %p54
      %p56 = scmp.ne.s32.totalorder %s45, %s48
      %p57 = scmp.eq.s32.totalorder %s26, 3
      %p58 = por %p56, %p57
      %p59 = scmp.ne.s32.totalorder %s48, %s49
      %p60 = scmp.eq.s32.totalorder %s26, 0
      %p61 = por %p59, %p60
      %p62 = scmp.ne.s32.totalorder %s48, %s49
      %p63 = scmp.eq.s32.totalorder %s27, 3
      %p64 = por %p62, %p63
      %p66 = scmp.ne.s32.totalorder %s49, %s65
      %p67 = scmp.eq.s32.totalorder %s27, 0
      %p68 = por %p66, %p67
      %s70 = sadd.s32 %s69, 1
      %p73 = scmp.eq.s32.totalorder %s21, 3
      %p74 = scmp.ne.s32.totalorder %s69, %s71
      %p75 = scmp.eq.s32.totalorder %s21, 0
      %p76 = por %p74, %p75
      %p77 = scmp.ne.s32.totalorder %s69, %s71
      %p78 = scmp.eq.s32.totalorder %s26, 3
      %p79 = por %p77, %p78
      %p80 = scmp.ne.s32.totalorder %s71, %s72
      %p81 = scmp.eq.s32.totalorder %s26, 0
      %p82 = por %p80, %p81
      %p83 = scmp.ne.s32.totalorder %s71, %s72
      %p84 = scmp.eq.s32.totalorder %s27, 3
      %p85 = por %p83, %p84
      %p87 = scmp.ne.s32.totalorder %s72, %s86
      %p88 = scmp.eq.s32.totalorder %s27, 0
      %p89 = por %p87, %p88
      %s90 = ssub.s32 %s28, %s40
      %s91 = ssub.s32 %s29, %s36
      %s92 = sor.u32 %s90, %s91
      %p93 = scmp.eq.s32.totalorder %s92, 0
      %s95 = sadd.s32 %s94, 1
      %s96 = scalar_select %p93, %s94, %s95
      %p99 = pneg %p93
      %p100 = scmp.eq.s32.totalorder %s21, 3
      %p101 = por %p99, %p100
      %p102 = scmp.ne.s32.totalorder %s94, %s97
      %p103 = scmp.eq.s32.totalorder %s21, 0
      %p104 = por %p102, %p103
      %p105 = scmp.ne.s32.totalorder %s94, %s97
      %p106 = scmp.eq.s32.totalorder %s26, 3
      %p107 = por %p105, %p106
      %p108 = scmp.ne.s32.totalorder %s97, %s98
      %p109 = scmp.eq.s32.totalorder %s26, 0
      %p110 = por %p108, %p109
      %p111 = scmp.ne.s32.totalorder %s97, %s98
      %p112 = scmp.eq.s32.totalorder %s27, 3
      %p113 = por %p111, %p112
      %p115 = scmp.ne.s32.totalorder %s98, %s114
      %p116 = scmp.eq.s32.totalorder %s27, 0
      %p117 = por %p115, %p116
      %s118 = ssub.s32 %s28, %s40
      %s119 = ssub.s32 %s29, %s36
      %s120 = sor.u32 %s118, %s119
      %p121 = scmp.eq.s32.totalorder %s120, 0
      %s123 = sadd.s32 %s122, 1
      %s124 = scalar_select %p121, %s122, %s123
      %p127 = pneg %p121
      %p128 = scmp.eq.s32.totalorder %s21, 3
      %p129 = por %p127, %p128
      %p130 = scmp.ne.s32.totalorder %s122, %s125
      %p131 = scmp.eq.s32.totalorder %s21, 0
      %p132 = por %p130, %p131
      %p133 = scmp.ne.s32.totalorder %s122, %s125
      %p134 = scmp.eq.s32.totalorder %s26, 3
      %p135 = por %p133, %p134
      %p136 = scmp.ne.s32.totalorder %s125, %s126
      %p137 = scmp.eq.s32.totalorder %s26, 0
      %p138 = por %p136, %p137
      %p139 = scmp.ne.s32.totalorder %s125, %s126
      %p140 = scmp.eq.s32.totalorder %s27, 3
      %p141 = por %p139, %p140
      %p143 = scmp.ne.s32.totalorder %s126, %s142
      %p144 = scmp.eq.s32.totalorder %s27, 0
      %p145 = por %p143, %p144
      %s146 = ssub.s32 %s28, %s40
      %s147 = ssub.s32 %s29, %s36
      %s148 = sor.u32 %s146, %s147
      %p149 = scmp.eq.s32.totalorder %s148, 0
      %s151 = sadd.s32 %s150, 1
      %s152 = scalar_select %p149, %s150, %s151
      %p155 = pneg %p149
      %p156 = scmp.eq.s32.totalorder %s21, 3
      %p157 = por %p155, %p156
      %p158 = scmp.ne.s32.totalorder %s150, %s153
      %p159 = scmp.eq.s32.totalorder %s21, 0
      %p160 = por %p158, %p159
      %p161 = scmp.ne.s32.totalorder %s150, %s153
      %p162 = scmp.eq.s32.totalorder %s26, 3
      %p163 = por %p161, %p162
      %p164 = scmp.ne.s32.totalorder %s153, %s154
      %p165 = scmp.eq.s32.totalorder %s26, 0
      %p166 = por %p164, %p165
      %p167 = scmp.ne.s32.totalorder %s153, %s154
      %p168 = scmp.eq.s32.totalorder %s27, 3
      %p169 = por %p167, %p168
      %p171 = scmp.ne.s32.totalorder %s154, %s170
      %p172 = scmp.eq.s32.totalorder %s27, 0
      %p173 = por %p171, %p172
      %p174 = scmp.le.s32.totalorder 1, %s21
      %p175 = scmp.lt.s32.totalorder %s21, 5
      %p176 = pnand %p174, %p175
      %p177 = pneg %p176
      // Predicated region
      $region9: #{tpu_custom_call.1} parent=5 // pred_check
        _
      $region10: #{tpu_custom_call.1} parent=5 // pred_check_branch
        %179 = sbr.rel (%p176) target = $region12
      $region11: #{tpu_custom_call.1} parent=5 // pred_region
        %s180 = ssub.s32 %s21, 1
        // Predicated region
        $region13: #{tpu_custom_call.1} parent=11 // pred_check
          %p181 = pneg %p82
        $region14: #{tpu_custom_call.1} parent=11 // pred_check_branch
          %183 = sbr.rel (%p181) target = $region16
        $region15: #{tpu_custom_call.1} parent=11 // pred_region
          %185 = vsyncadd [#allocation6], 0
          %s186 = sshll.u32 %s1, 4
          %s187 = int_to_ptr.hbm [resolvable:$true] %s186
          %s188 = sshll.u32 [#allocation5], 4
          %s189 = int_to_ptr.vmem [resolvable:$true] %s188
          %194 = dma.hbm_to_vmem [thread:$0]  %s187, 6144, %s189, [#allocation6], 384, 384, 24
        $region16: #{tpu_custom_call.1} parent=11 // pred_fallthru
          _
      $region12: #{tpu_custom_call.1} parent=5 // pred_fallthru
        _
      %p195 = scmp.lt.s32.totalorder %s21, 4
      // Predicated region
      $region17: #{tpu_custom_call.1} parent=5 // pred_check
        %p196 = pneg %p195
      $region18: #{tpu_custom_call.1} parent=5 // pred_check_branch
        %198 = sbr.rel (%p196) target = $region20
      $region19: #{tpu_custom_call.1} parent=5 // pred_region
        // Predicated region
        $region21: #{tpu_custom_call.1} parent=19 // pred_check
          %p199 = pneg %p55
        $region22: #{tpu_custom_call.1} parent=19 // pred_check_branch
          %201 = sbr.rel (%p199) target = $region24
        $region23: #{tpu_custom_call.1} parent=19 // pred_region
          %s202 = sand.u32 %s45, 1
          %s203 = scalar_lea.sflag [#allocation3], %s202
          %s204 = sand.u32 %s45, 1
          %s205 = smul.addr %s204, 128
          %s206 = scalar_lea.vmem [#allocation2], %s205
          %s207 = smul.u32 16, %s29
          %209 = vsyncadd %s203, 0
          %s210 = smul.addr %s28, 32
          %s211 = sadd.s32 %s207, %s210
          %s212 = smul.addr %s211, 8
          %s213 = scalar_lea.hbm %s0, %s212
          %s214 = sshll.u32 %s213, 4
          %s215 = int_to_ptr.hbm [resolvable:$true] %s214
          %s216 = sshll.u32 %s206, 4
          %s217 = int_to_ptr.vmem [resolvable:$true] %s216
          %222 = dma.hbm_to_vmem [thread:$0]  %s215, 2048, %s217, %s203, 128, 128, 8
        $region24: #{tpu_custom_call.1} parent=19 // pred_fallthru
          _
      $region20: #{tpu_custom_call.1} parent=5 // pred_fallthru
        _
      %p223 = scmp.le.s32.totalorder 1, %s21
      %p224 = scmp.lt.s32.totalorder %s21, 5
      %p225 = pnand %p223, %p224
      %p226 = pneg %p225
      // Predicated region
      $region25: #{tpu_custom_call.1} parent=5 // pred_check
        _
      $region26: #{tpu_custom_call.1} parent=5 // pred_check_branch
        %228 = sbr.rel (%p225) target = $region28
      $region27: #{tpu_custom_call.1} parent=5 // pred_region
        %s229 = ssub.s32 %s21, 1
        %s230 = sand.u32 %s48, 1
        %s231 = scalar_lea.sflag [#allocation3], %s230
        %s232 = sand.u32 %s48, 1
        %s233 = smul.addr %s232, 128
        %s234 = scalar_lea.vmem [#allocation2], %s233
        // Predicated region
        $region29: #{tpu_custom_call.1} parent=27 // pred_check
          %p235 = pneg %p61
        $region30: #{tpu_custom_call.1} parent=27 // pred_check_branch
          %237 = sbr.rel (%p235) target = $region32
        $region31: #{tpu_custom_call.1} parent=27 // pred_region
          %239 = dma.done %s231, 2048
        $region32: #{tpu_custom_call.1} parent=27 // pred_fallthru
          _
        // Predicated region
        $region33: #{tpu_custom_call.1} parent=27 // pred_check
          %p240 = pneg %p82
        $region34: #{tpu_custom_call.1} parent=27 // pred_check_branch
          %242 = sbr.rel (%p240) target = $region36
        $region35: #{tpu_custom_call.1} parent=27 // pred_region
          %244 = dma.done [#allocation6], 6144
        $region36: #{tpu_custom_call.1} parent=27 // pred_fallthru
          _
        %s245 = sand.u32 %s48, 1
        %s246 = scalar_lea.sflag [#allocation3], %s245
        %s247 = sand.u32 %s48, 1
        %s248 = smul.addr %s247, 128
        %s249 = scalar_lea.vmem [#allocation2], %s248
        %p250 = pneg %p61
        %p251 = pneg %p58
        %p252 = pneg %p82
        %p253 = pneg %p79
        %p254 = pneg %p110
        %p255 = pneg %p107
        %s256 = sand.u32 %s97, 1
        %s257 = scalar_lea.sflag [#allocation4], %s256
        %s258 = sand.u32 %s97, 1
        %s259 = smul.addr %s258, 128
        %s260 = scalar_lea.vmem [#allocation7], %s259
        %p261 = pneg %p138
        %p262 = pneg %p135
        %s263 = sand.u32 %s26, 1
        %s264 = scalar_lea.sflag [#allocation9], %s263
        %s265 = sand.u32 %s125, 1
        %s266 = smul.addr %s265, 128
        %s267 = scalar_lea.vmem [#allocation8], %s266
        %p268 = pneg %p166
        %p269 = pneg %p163
        %s270 = sand.u32 %s26, 1
        %s271 = scalar_lea.sflag [#allocation9], %s270
        %s272 = sand.u32 %s153, 1
        %s273 = smul.addr %s272, 128
        %s274 = scalar_lea.vmem [#allocation10], %s273
        %s275 = smul.u32 16, %s31
        %s276 = smul.u32 16, %s31
        %s277 = smul.u32 16, %s31
        %s278 = smul.u32 16, %s31
        %v279 = vld [vmem:[%s234] sm:$0xff]
        %v280 = vld [vmem:[%s234 + $0x8] sm:$0xff]
        %v281 = vld [vmem:[%s234 + $0x10] sm:$0xff]
        %v282 = vld [vmem:[%s234 + $0x18] sm:$0xff]
        %v283 = vld [vmem:[%s234 + $0x20] sm:$0xff]
        %v284 = vld [vmem:[%s234 + $0x28] sm:$0xff]
        %v285 = vld [vmem:[%s234 + $0x30] sm:$0xff]
        %v286 = vld [vmem:[%s234 + $0x38] sm:$0xff]
        %v287 = vld [vmem:[%s234 + $0x40] sm:$0xff]
        %v288 = vld [vmem:[%s234 + $0x48] sm:$0xff]
        %v289 = vld [vmem:[%s234 + $0x50] sm:$0xff]
        %v290 = vld [vmem:[%s234 + $0x58] sm:$0xff]
        %v291 = vld [vmem:[%s234 + $0x60] sm:$0xff]
        %v292 = vld [vmem:[%s234 + $0x68] sm:$0xff]
        %v293 = vld [vmem:[%s234 + $0x70] sm:$0xff]
        %v294 = vld [vmem:[%s234 + $0x78] sm:$0xff]
        %v295 = vld [vmem:[#allocation5] sm:$0xff]
        %v296 = vld [vmem:[#allocation5 + $0x8] sm:$0xff]
        %v297 = vld [vmem:[#allocation5 + $0x10] sm:$0xff]
        %v298 = vld [vmem:[#allocation5 + $0x18] sm:$0xff]
        %v299 = vld [vmem:[#allocation5 + $0x20] sm:$0xff]
        %v300 = vld [vmem:[#allocation5 + $0x28] sm:$0xff]
        %v301 = vld [vmem:[#allocation5 + $0x30] sm:$0xff]
        %v302 = vld [vmem:[#allocation5 + $0x38] sm:$0xff]
        %v303 = vld [vmem:[#allocation5 + $0x40] sm:$0xff]
        %v304 = vld [vmem:[#allocation5 + $0x48] sm:$0xff]
        %v305 = vld [vmem:[#allocation5 + $0x50] sm:$0xff]
        %v306 = vld [vmem:[#allocation5 + $0x58] sm:$0xff]
        %v307 = vld [vmem:[#allocation5 + $0x60] sm:$0xff]
        %v308 = vld [vmem:[#allocation5 + $0x68] sm:$0xff]
        %v309 = vld [vmem:[#allocation5 + $0x70] sm:$0xff]
        %v310 = vld [vmem:[#allocation5 + $0x78] sm:$0xff]
        %v311 = vld [vmem:[#allocation5 + $0x80] sm:$0xff]
        %v312 = vld [vmem:[#allocation5 + $0x88] sm:$0xff]
        %v313 = vld [vmem:[#allocation5 + $0x90] sm:$0xff]
        %v314 = vld [vmem:[#allocation5 + $0x98] sm:$0xff]
        %v315 = vld [vmem:[#allocation5 + $0xa0] sm:$0xff]
        %v316 = vld [vmem:[#allocation5 + $0xa8] sm:$0xff]
        %v317 = vld [vmem:[#allocation5 + $0xb0] sm:$0xff]
        %v318 = vld [vmem:[#allocation5 + $0xb8] sm:$0xff]
        %v319 = vld [vmem:[#allocation5 + $0xc0] sm:$0xff]
        %v320 = vld [vmem:[#allocation5 + $0xc8] sm:$0xff]
        %v321 = vld [vmem:[#allocation5 + $0xd0] sm:$0xff]
        %v322 = vld [vmem:[#allocation5 + $0xd8] sm:$0xff]
        %v323 = vld [vmem:[#allocation5 + $0xe0] sm:$0xff]
        %v324 = vld [vmem:[#allocation5 + $0xe8] sm:$0xff]
        %v325 = vld [vmem:[#allocation5 + $0xf0] sm:$0xff]
        %v326 = vld [vmem:[#allocation5 + $0xf8] sm:$0xff]
        %v327 = vld [vmem:[#allocation5 + $0x100] sm:$0xff]
        %v328 = vld [vmem:[#allocation5 + $0x108] sm:$0xff]
        %v329 = vld [vmem:[#allocation5 + $0x110] sm:$0xff]
        %v330 = vld [vmem:[#allocation5 + $0x118] sm:$0xff]
        %v331 = vld [vmem:[#allocation5 + $0x120] sm:$0xff]
        %v332 = vld [vmem:[#allocation5 + $0x128] sm:$0xff]
        %v333 = vld [vmem:[#allocation5 + $0x130] sm:$0xff]
        %v334 = vld [vmem:[#allocation5 + $0x138] sm:$0xff]
        %v335 = vld [vmem:[#allocation5 + $0x140] sm:$0xff]
        %v336 = vld [vmem:[#allocation5 + $0x148] sm:$0xff]
        %v337 = vld [vmem:[#allocation5 + $0x150] sm:$0xff]
        %v338 = vld [vmem:[#allocation5 + $0x158] sm:$0xff]
        %v339 = vld [vmem:[#allocation5 + $0x160] sm:$0xff]
        %v340 = vld [vmem:[#allocation5 + $0x168] sm:$0xff]
        %v341 = vld [vmem:[#allocation5 + $0x170] sm:$0xff]
        %v342 = vld [vmem:[#allocation5 + $0x178] sm:$0xff]
        %343 = vmatpush.msra.mxu0 %v340
        %344 = vmatpush.msra.mxu0 %v337
        %345 = vmatpush.msra.mxu0 %v334
        %346 = vmatpush.msra.mxu0 %v331
        %347 = vmatpush.msra.mxu0 %v328
        %348 = vmatpush.msra.mxu0 %v325
        %349 = vmatpush.msra.mxu0 %v322
        %350 = vmatpush.msra.mxu0 %v319
        %351 = vmatpush.msra.mxu0 %v316
        %352 = vmatpush.msra.mxu0 %v313
        %353 = vmatpush.msra.mxu0 %v310
        %354 = vmatpush.msra.mxu0 %v307
        %355 = vmatpush.msra.mxu0 %v304
        %356 = vmatpush.msra.mxu0 %v301
        %357 = vmatpush.msra.mxu0 %v298
        %358 = vmatpush.msra.mxu0 %v295
        %359 = vmatmul.f32.gmra.mxu0 %v279
        %v360 = vpop.f32.mrf.mxu0
        %v361 = vadd.f32 0.0, %v360
        %362 = vmatmul.f32.gmra.mxu0 %v280
        %v363 = vpop.f32.mrf.mxu0
        %v364 = vadd.f32 0.0, %v363
        %365 = vmatmul.f32.gmra.mxu0 %v281
        %v366 = vpop.f32.mrf.mxu0
        %v367 = vadd.f32 0.0, %v366
        %368 = vmatmul.f32.gmra.mxu0 %v282
        %v369 = vpop.f32.mrf.mxu0
        %v370 = vadd.f32 0.0, %v369
        %371 = vmatmul.f32.gmra.mxu0 %v283
        %v372 = vpop.f32.mrf.mxu0
        %v373 = vadd.f32 0.0, %v372
        %374 = vmatmul.f32.gmra.mxu0 %v284
        %v375 = vpop.f32.mrf.mxu0
        %v376 = vadd.f32 0.0, %v375
        %377 = vmatmul.f32.gmra.mxu0 %v285
        %v378 = vpop.f32.mrf.mxu0
        %v379 = vadd.f32 0.0, %v378
        %380 = vmatmul.f32.gmra.mxu0 %v286
        %v381 = vpop.f32.mrf.mxu0
        %v382 = vadd.f32 0.0, %v381
        %383 = vmatmul.f32.gmra.mxu0 %v287
        %v384 = vpop.f32.mrf.mxu0
        %v385 = vadd.f32 0.0, %v384
        %386 = vmatmul.f32.gmra.mxu0 %v288
        %v387 = vpop.f32.mrf.mxu0
        %v388 = vadd.f32 0.0, %v387
        %389 = vmatmul.f32.gmra.mxu0 %v289
        %v390 = vpop.f32.mrf.mxu0
        %v391 = vadd.f32 0.0, %v390
        %392 = vmatmul.f32.gmra.mxu0 %v290
        %v393 = vpop.f32.mrf.mxu0
        %v394 = vadd.f32 0.0, %v393
        %395 = vmatmul.f32.gmra.mxu0 %v291
        %v396 = vpop.f32.mrf.mxu0
        %v397 = vadd.f32 0.0, %v396
        %398 = vmatmul.f32.gmra.mxu0 %v292
        %v399 = vpop.f32.mrf.mxu0
        %v400 = vadd.f32 0.0, %v399
        %401 = vmatmul.f32.gmra.mxu0 %v293
        %v402 = vpop.f32.mrf.mxu0
        %v403 = vadd.f32 0.0, %v402
        %404 = vmatmul.f32.gmra.mxu0 %v294
        %v405 = vpop.f32.mrf.mxu0
        %v406 = vadd.f32 0.0, %v405
        %407 = vdwg.mxu0
        %408 = vmatpush.msra.mxu0 %v341
        %409 = vmatpush.msra.mxu0 %v338
        %410 = vmatpush.msra.mxu0 %v335
        %411 = vmatpush.msra.mxu0 %v332
        %412 = vmatpush.msra.mxu0 %v329
        %413 = vmatpush.msra.mxu0 %v326
        %414 = vmatpush.msra.mxu0 %v323
        %415 = vmatpush.msra.mxu0 %v320
        %416 = vmatpush.msra.mxu0 %v317
        %417 = vmatpush.msra.mxu0 %v314
        %418 = vmatpush.msra.mxu0 %v311
        %419 = vmatpush.msra.mxu0 %v308
        %420 = vmatpush.msra.mxu0 %v305
        %421 = vmatpush.msra.mxu0 %v302
        %422 = vmatpush.msra.mxu0 %v299
        %423 = vmatpush.msra.mxu0 %v296
        %424 = vmatmul.f32.gmra.mxu0 %v279
        %v425 = vpop.f32.mrf.mxu0
        %v426 = vadd.f32 0.0, %v425
        %427 = vmatmul.f32.gmra.mxu0 %v280
        %v428 = vpop.f32.mrf.mxu0
        %v429 = vadd.f32 0.0, %v428
        %430 = vmatmul.f32.gmra.mxu0 %v281
        %v431 = vpop.f32.mrf.mxu0
        %v432 = vadd.f32 0.0, %v431
        %433 = vmatmul.f32.gmra.mxu0 %v282
        %v434 = vpop.f32.mrf.mxu0
        %v435 = vadd.f32 0.0, %v434
        %436 = vmatmul.f32.gmra.mxu0 %v283
        %v437 = vpop.f32.mrf.mxu0
        %v438 = vadd.f32 0.0, %v437
        %439 = vmatmul.f32.gmra.mxu0 %v284
        %v440 = vpop.f32.mrf.mxu0
        %v441 = vadd.f32 0.0, %v440
        %442 = vmatmul.f32.gmra.mxu0 %v285
        %v443 = vpop.f32.mrf.mxu0
        %v444 = vadd.f32 0.0, %v443
        %445 = vmatmul.f32.gmra.mxu0 %v286
        %v446 = vpop.f32.mrf.mxu0
        %v447 = vadd.f32 0.0, %v446
        %448 = vmatmul.f32.gmra.mxu0 %v287
        %v449 = vpop.f32.mrf.mxu0
        %v450 = vadd.f32 0.0, %v449
        %451 = vmatmul.f32.gmra.mxu0 %v288
        %v452 = vpop.f32.mrf.mxu0
        %v453 = vadd.f32 0.0, %v452
        %454 = vmatmul.f32.gmra.mxu0 %v289
        %v455 = vpop.f32.mrf.mxu0
        %v456 = vadd.f32 0.0, %v455
        %457 = vmatmul.f32.gmra.mxu0 %v290
        %v458 = vpop.f32.mrf.mxu0
        %v459 = vadd.f32 0.0, %v458
        %460 = vmatmul.f32.gmra.mxu0 %v291
        %v461 = vpop.f32.mrf.mxu0
        %v462 = vadd.f32 0.0, %v461
        %463 = vmatmul.f32.gmra.mxu0 %v292
        %v464 = vpop.f32.mrf.mxu0
        %v465 = vadd.f32 0.0, %v464
        %466 = vmatmul.f32.gmra.mxu0 %v293
        %v467 = vpop.f32.mrf.mxu0
        %v468 = vadd.f32 0.0, %v467
        %469 = vmatmul.f32.gmra.mxu0 %v294
        %v470 = vpop.f32.mrf.mxu0
        %v471 = vadd.f32 0.0, %v470
        %472 = vdwg.mxu0
        %473 = vmatpush.msra.mxu0 %v342
        %474 = vmatpush.msra.mxu0 %v339
        %475 = vmatpush.msra.mxu0 %v336
        %476 = vmatpush.msra.mxu0 %v333
        %477 = vmatpush.msra.mxu0 %v330
        %478 = vmatpush.msra.mxu0 %v327
        %479 = vmatpush.msra.mxu0 %v324
        %480 = vmatpush.msra.mxu0 %v321
        %481 = vmatpush.msra.mxu0 %v318
        %482 = vmatpush.msra.mxu0 %v315
        %483 = vmatpush.msra.mxu0 %v312
        %484 = vmatpush.msra.mxu0 %v309
        %485 = vmatpush.msra.mxu0 %v306
        %486 = vmatpush.msra.mxu0 %v303
        %487 = vmatpush.msra.mxu0 %v300
        %488 = vmatpush.msra.mxu0 %v297
        %489 = vmatmul.f32.gmra.mxu0 %v279
        %v490 = vpop.f32.mrf.mxu0
        %v491 = vadd.f32 0.0, %v490
        %492 = vmatmul.f32.gmra.mxu0 %v280
        %v493 = vpop.f32.mrf.mxu0
        %v494 = vadd.f32 0.0, %v493
        %495 = vmatmul.f32.gmra.mxu0 %v281
        %v496 = vpop.f32.mrf.mxu0
        %v497 = vadd.f32 0.0, %v496
        %498 = vmatmul.f32.gmra.mxu0 %v282
        %v499 = vpop.f32.mrf.mxu0
        %v500 = vadd.f32 0.0, %v499
        %501 = vmatmul.f32.gmra.mxu0 %v283
        %v502 = vpop.f32.mrf.mxu0
        %v503 = vadd.f32 0.0, %v502
        %504 = vmatmul.f32.gmra.mxu0 %v284
        %v505 = vpop.f32.mrf.mxu0
        %v506 = vadd.f32 0.0, %v505
        %507 = vmatmul.f32.gmra.mxu0 %v285
        %v508 = vpop.f32.mrf.mxu0
        %v509 = vadd.f32 0.0, %v508
        %510 = vmatmul.f32.gmra.mxu0 %v286
        %v511 = vpop.f32.mrf.mxu0
        %v512 = vadd.f32 0.0, %v511
        %513 = vmatmul.f32.gmra.mxu0 %v287
        %v514 = vpop.f32.mrf.mxu0
        %v515 = vadd.f32 0.0, %v514
        %516 = vmatmul.f32.gmra.mxu0 %v288
        %v517 = vpop.f32.mrf.mxu0
        %v518 = vadd.f32 0.0, %v517
        %519 = vmatmul.f32.gmra.mxu0 %v289
        %v520 = vpop.f32.mrf.mxu0
        %v521 = vadd.f32 0.0, %v520
        %522 = vmatmul.f32.gmra.mxu0 %v290
        %v523 = vpop.f32.mrf.mxu0
        %v524 = vadd.f32 0.0, %v523
        %525 = vmatmul.f32.gmra.mxu0 %v291
        %v526 = vpop.f32.mrf.mxu0
        %v527 = vadd.f32 0.0, %v526
        %528 = vmatmul.f32.gmra.mxu0 %v292
        %v529 = vpop.f32.mrf.mxu0
        %v530 = vadd.f32 0.0, %v529
        %531 = vmatmul.f32.gmra.mxu0 %v293
        %v532 = vpop.f32.mrf.mxu0
        %v533 = vadd.f32 0.0, %v532
        %534 = vmatmul.f32.gmra.mxu0 %v294
        %v535 = vpop.f32.mrf.mxu0
        %v536 = vadd.f32 0.0, %v535
        %537 = vdwg.mxu0
        %538 = vst [vmem:[%s260] sm:$0xff] %v361
        %539 = vst [vmem:[%s260 + $0x8] sm:$0xff] %v364
        %540 = vst [vmem:[%s260 + $0x10] sm:$0xff] %v367
        %541 = vst [vmem:[%s260 + $0x18] sm:$0xff] %v370
        %542 = vst [vmem:[%s260 + $0x20] sm:$0xff] %v373
        %543 = vst [vmem:[%s260 + $0x28] sm:$0xff] %v376
        %544 = vst [vmem:[%s260 + $0x30] sm:$0xff] %v379
        %545 = vst [vmem:[%s260 + $0x38] sm:$0xff] %v382
        %546 = vst [vmem:[%s260 + $0x40] sm:$0xff] %v385
        %547 = vst [vmem:[%s260 + $0x48] sm:$0xff] %v388
        %548 = vst [vmem:[%s260 + $0x50] sm:$0xff] %v391
        %549 = vst [vmem:[%s260 + $0x58] sm:$0xff] %v394
        %550 = vst [vmem:[%s260 + $0x60] sm:$0xff] %v397
        %551 = vst [vmem:[%s260 + $0x68] sm:$0xff] %v400
        %552 = vst [vmem:[%s260 + $0x70] sm:$0xff] %v403
        %553 = vst [vmem:[%s260 + $0x78] sm:$0xff] %v406
        %554 = vst [vmem:[%s267] sm:$0xff] %v426
        %555 = vst [vmem:[%s267 + $0x8] sm:$0xff] %v429
        %556 = vst [vmem:[%s267 + $0x10] sm:$0xff] %v432
        %557 = vst [vmem:[%s267 + $0x18] sm:$0xff] %v435
        %558 = vst [vmem:[%s267 + $0x20] sm:$0xff] %v438
        %559 = vst [vmem:[%s267 + $0x28] sm:$0xff] %v441
        %560 = vst [vmem:[%s267 + $0x30] sm:$0xff] %v444
        %561 = vst [vmem:[%s267 + $0x38] sm:$0xff] %v447
        %562 = vst [vmem:[%s267 + $0x40] sm:$0xff] %v450
        %563 = vst [vmem:[%s267 + $0x48] sm:$0xff] %v453
        %564 = vst [vmem:[%s267 + $0x50] sm:$0xff] %v456
        %565 = vst [vmem:[%s267 + $0x58] sm:$0xff] %v459
        %566 = vst [vmem:[%s267 + $0x60] sm:$0xff] %v462
        %567 = vst [vmem:[%s267 + $0x68] sm:$0xff] %v465
        %568 = vst [vmem:[%s267 + $0x70] sm:$0xff] %v468
        %569 = vst [vmem:[%s267 + $0x78] sm:$0xff] %v471
        %570 = vst [vmem:[%s274] sm:$0xff] %v491
        %571 = vst [vmem:[%s274 + $0x8] sm:$0xff] %v494
        %572 = vst [vmem:[%s274 + $0x10] sm:$0xff] %v497
        %573 = vst [vmem:[%s274 + $0x18] sm:$0xff] %v500
        %574 = vst [vmem:[%s274 + $0x20] sm:$0xff] %v503
        %575 = vst [vmem:[%s274 + $0x28] sm:$0xff] %v506
        %576 = vst [vmem:[%s274 + $0x30] sm:$0xff] %v509
        %577 = vst [vmem:[%s274 + $0x38] sm:$0xff] %v512
        %578 = vst [vmem:[%s274 + $0x40] sm:$0xff] %v515
        %579 = vst [vmem:[%s274 + $0x48] sm:$0xff] %v518
        %580 = vst [vmem:[%s274 + $0x50] sm:$0xff] %v521
        %581 = vst [vmem:[%s274 + $0x58] sm:$0xff] %v524
        %582 = vst [vmem:[%s274 + $0x60] sm:$0xff] %v527
        %583 = vst [vmem:[%s274 + $0x68] sm:$0xff] %v530
        %584 = vst [vmem:[%s274 + $0x70] sm:$0xff] %v533
        %585 = vst [vmem:[%s274 + $0x78] sm:$0xff] %v536
        %s586 = sand.u32 %s97, 1
        %s587 = scalar_lea.sflag [#allocation4], %s586
        %s588 = sand.u32 %s97, 1
        %s589 = smul.addr %s588, 128
        %s590 = scalar_lea.vmem [#allocation7], %s589
        %s591 = sand.u32 %s26, 1
        %s592 = scalar_lea.sflag [#allocation9], %s591
        %s593 = sand.u32 %s125, 1
        %s594 = smul.addr %s593, 128
        %s595 = scalar_lea.vmem [#allocation8], %s594
        %s596 = sand.u32 %s26, 1
        %s597 = scalar_lea.sflag [#allocation9], %s596
        %s598 = sand.u32 %s153, 1
        %s599 = smul.addr %s598, 128
        %s600 = scalar_lea.vmem [#allocation10], %s599
        // Predicated region
        $region37: #{tpu_custom_call.1} parent=27 // pred_check
          %p601 = pneg %p107
        $region38: #{tpu_custom_call.1} parent=27 // pred_check_branch
          %603 = sbr.rel (%p601) target = $region40
        $region39: #{tpu_custom_call.1} parent=27 // pred_region
          %s604 = smul.u32 16, %s31
          %606 = vsyncadd %s587, 0
          %s607 = smul.addr %s30, 32
          %s608 = sadd.s32 %s604, %s607
          %s609 = smul.addr %s608, 8
          %s610 = scalar_lea.hbm %s2, %s609
          %s611 = sshll.u32 %s590, 4
          %s612 = int_to_ptr.vmem [resolvable:$true] %s611
          %s613 = sshll.u32 %s610, 4
          %s614 = int_to_ptr.hbm [resolvable:$true] %s613
          %619 = dma.vmem_to_hbm [thread:$0]  %s612, 2048, %s614, %s587, 128, 128, 8
        $region40: #{tpu_custom_call.1} parent=27 // pred_fallthru
          _
        // Predicated region
        $region41: #{tpu_custom_call.1} parent=27 // pred_check
          %p620 = pneg %p135
        $region42: #{tpu_custom_call.1} parent=27 // pred_check_branch
          %622 = sbr.rel (%p620) target = $region44
        $region43: #{tpu_custom_call.1} parent=27 // pred_region
          %s623 = smul.u32 16, %s31
          %625 = vsyncadd %s592, 0
          %s626 = smul.addr %s30, 32
          %s627 = sadd.s32 %s623, %s626
          %s628 = smul.addr %s627, 8
          %s629 = scalar_lea.hbm %s3, %s628
          %s630 = sshll.u32 %s595, 4
          %s631 = int_to_ptr.vmem [resolvable:$true] %s630
          %s632 = sshll.u32 %s629, 4
          %s633 = int_to_ptr.hbm [resolvable:$true] %s632
          %638 = dma.vmem_to_hbm [thread:$0]  %s631, 2048, %s633, %s592, 128, 128, 8
        $region44: #{tpu_custom_call.1} parent=27 // pred_fallthru
          _
        // Predicated region
        $region45: #{tpu_custom_call.1} parent=27 // pred_check
          %p639 = pneg %p163
        $region46: #{tpu_custom_call.1} parent=27 // pred_check_branch
          %641 = sbr.rel (%p639) target = $region48
        $region47: #{tpu_custom_call.1} parent=27 // pred_region
          %s642 = smul.u32 16, %s31
          %644 = vsyncadd %s597, 0
          %s645 = smul.addr %s30, 32
          %s646 = sadd.s32 %s642, %s645
          %s647 = smul.addr %s646, 8
          %s648 = scalar_lea.hbm %s4, %s647
          %s649 = sshll.u32 %s600, 4
          %s650 = int_to_ptr.vmem [resolvable:$true] %s649
          %s651 = sshll.u32 %s648, 4
          %s652 = int_to_ptr.hbm [resolvable:$true] %s651
          %657 = dma.vmem_to_hbm [thread:$0]  %s650, 2048, %s652, %s597, 128, 128, 8
        $region48: #{tpu_custom_call.1} parent=27 // pred_fallthru
          _
      $region28: #{tpu_custom_call.1} parent=5 // pred_fallthru
        _
      %p658 = scmp.le.s32.totalorder 2, %s21
      // Predicated region
      $region49: #{tpu_custom_call.1} parent=5 // pred_check
        %p659 = pneg %p658
      $region50: #{tpu_custom_call.1} parent=5 // pred_check_branch
        %661 = sbr.rel (%p659) target = $region52
      $region51: #{tpu_custom_call.1} parent=5 // pred_region
        %s662 = ssub.s32 %s21, 2
        // Predicated region
        $region53: #{tpu_custom_call.1} parent=51 // pred_check
          %p663 = pneg %p113
        $region54: #{tpu_custom_call.1} parent=51 // pred_check_branch
          %665 = sbr.rel (%p663) target = $region56
        $region55: #{tpu_custom_call.1} parent=51 // pred_region
          %s666 = sand.u32 %s98, 1
          %s667 = scalar_lea.sflag [#allocation4], %s666
          %s668 = sand.u32 %s98, 1
          %s669 = smul.addr %s668, 128
          %s670 = scalar_lea.vmem [#allocation7], %s669
          %672 = dma.done %s667, 2048
        $region56: #{tpu_custom_call.1} parent=51 // pred_fallthru
          _
        // Predicated region
        $region57: #{tpu_custom_call.1} parent=51 // pred_check
          %p673 = pneg %p141
        $region58: #{tpu_custom_call.1} parent=51 // pred_check_branch
          %675 = sbr.rel (%p673) target = $region60
        $region59: #{tpu_custom_call.1} parent=51 // pred_region
          %s676 = sand.u32 %s27, 1
          %s677 = scalar_lea.sflag [#allocation9], %s676
          %s678 = sand.u32 %s126, 1
          %s679 = smul.addr %s678, 128
          %s680 = scalar_lea.vmem [#allocation8], %s679
          %682 = dma.done %s677, 2048
        $region60: #{tpu_custom_call.1} parent=51 // pred_fallthru
          _
        // Predicated region
        $region61: #{tpu_custom_call.1} parent=51 // pred_check
          %p683 = pneg %p169
        $region62: #{tpu_custom_call.1} parent=51 // pred_check_branch
          %685 = sbr.rel (%p683) target = $region64
        $region63: #{tpu_custom_call.1} parent=51 // pred_region
          %s686 = sand.u32 %s27, 1
          %s687 = scalar_lea.sflag [#allocation9], %s686
          %s688 = sand.u32 %s154, 1
          %s689 = smul.addr %s688, 128
          %s690 = scalar_lea.vmem [#allocation10], %s689
          %692 = dma.done %s687, 2048
        $region64: #{tpu_custom_call.1} parent=51 // pred_fallthru
          _
      $region52: #{tpu_custom_call.1} parent=5 // pred_fallthru
        _
    $region6: #{tpu_custom_call.1} parent=1 // loop_footer
      %s25 = sadd.s32 1, %s21
    $region7: #{tpu_custom_call.1} parent=1 // loop_footer_branch
      %20 = sbr.rel target = $region3
    $region8: #{tpu_custom_call.1} parent=1 // loop_exit
      _
    %693 = vsyncpa [#allocation3], 1
    %s694 = scalar_lea.sflag [#allocation3], 1
    %695 = vsyncpa %s694, 1
    %696 = vsyncpa [#allocation6], 1
    %697 = vsyncpa [#allocation4], 1
    %s698 = scalar_lea.sflag [#allocation4], 1
    %699 = vsyncpa %s698, 1
    %700 = vsyncpa [#allocation9], 1
    %s701 = scalar_lea.sflag [#allocation9], 1
    %702 = vsyncpa %s701, 1

</llo_original>
